<compile_context>
chip_gen: v6e
topology: v6e:2x2x1
jax: 0.10.0
libtpu: 0.0.40
codegen_flags: <defaults>
</compile_context>

<pallas_src>
import functools

import jax
import jax.numpy as jnp
from jax.experimental import pallas as pl
from jax.experimental.pallas import tpu as pltpu

_LANE = 128             # vreg lane width
_MAX_BATCH_TILE = 512   # upper bound on batch-tile rows
_SUBLANE_BY_ITEMSIZE = {4: 8, 2: 16, 1: 32}

# Lazily probed: does this JAX build accept pipeline_mode=pl.Buffered(1) on
# pallas_call BlockSpecs (single-buffering the grid-constant W / b blocks)?
_single_buffer_params_ok = None


def _last_step_linear_kernel(x_ref, w_ref, b_ref, o_ref):
    # x_ref: (TB, D) rows of the LAST time step only (f32 or bf16)
    # w_ref: (D, Fp) same dtype as x;  b_ref: (1, Fp) f32;  o_ref: (TB, Fp) f32
    h = jnp.dot(x_ref[...], w_ref[...], preferred_element_type=jnp.float32)
    o_ref[...] = jnp.maximum(h + b_ref[...], 0.0).astype(o_ref.dtype)


def _vmem_limit_bytes():
    """Generation-aware VMEM budget: ~3/4 of physical, capped at 96 MiB.
    -> ~48 MiB on v7x (64 MiB / TensorCore), 96 MiB on v5e/v6e (128 MiB)."""
    cap = 64 * 1024 * 1024
    try:
        cap = int(getattr(pltpu.get_tpu_info(), "vmem_capacity_bytes", cap))
    except Exception:
        pass
    return int(min(cap * 3 // 4, 96 * 1024 * 1024))


def _vmem_feasible_tile_cap(D, Fp, x_bytes, w_bytes, sublane, budget):
    """Largest batch tile (multiple of `sublane`, <= _MAX_BATCH_TILE) whose
    pipeline buffers fit in `budget` VMEM bytes.  Conservatively assumes
    double-buffered x/out blocks and double-buffered W (the Buffered(1) path
    only adds headroom)."""
    fixed = 2 * D * Fp * w_bytes + 2 * Fp * 4        # weights + bias
    per_row = 2 * D * x_bytes + 2 * Fp * 4           # x block + out block
    if fixed + sublane * per_row > budget:
        # Weights alone (nearly) blow the budget.
        # TODO(synk): add a K-reduction grid axis with a VMEM f32 accumulator
        # (pl.when init / writeback) once 2*D*Fp*w_bytes exceeds ~16 MiB on
        # v7x (~32 MiB on v5e/v6e) so W no longer has to be fully resident.
        return sublane
    t = min(_MAX_BATCH_TILE, (budget - fixed) // per_row)
    return max(sublane, int(t) // sublane * sublane)


def _pick_batch_tile(B, sublane, cap):
    """Return (tile_rows, needs_batch_pad).

    Prefers the largest multiple of `sublane` <= cap that divides B while
    still giving >= 2 grid tiles (so both v7x TensorCores get work).  A batch
    too small for two tiles uses a single full-batch block, which is a legal
    block shape even when B is not a multiple of the sublane count."""
    cap = max(cap, sublane)
    if B % sublane == 0:
        upper = min(cap, (B // 2) // sublane * sublane)
        for t in range(upper, 0, -sublane):
            if B % t == 0:
                return t, False
        return min(B, cap), False          # B < 2*sublane: single tile
    if B <= cap:
        return B, False                    # ragged small batch: one full block
    # Ragged large batch: tile at `cap` and pad the (tiny) last-step slice.
    # TODO(synk): a pl.Element-based row gather on (B, T, D) could keep the
    # zero-copy path here instead of materializing x[:, -1, :].
    return cap, True


@functools.partial(
    jax.jit,
    static_argnames=("tb", "zero_copy", "single_buffer_params", "vmem_limit"))
def _last_step_impl(x, w, b, *, tb, zero_copy, single_buffer_params, vmem_limit):
    B, T, D = x.shape
    F = w.shape[1]
    Fp = pl.cdiv(F, _LANE) * _LANE          # lane-dense output / MXU N dim

    # MXU operand dtype follows x (bf16 in -> bf16 matmul, f32 accumulation).
    w_p = w.astype(x.dtype)
    if Fp != F:
        w_p = jnp.pad(w_p, ((0, 0), (0, Fp - F)))
    b_p = jnp.pad(b.astype(jnp.float32), (0, Fp - F)).reshape(1, Fp)

    if zero_copy:
        # (B, T, D) -> (B, T*D) is a free view; the x BlockSpec's column-block
        # index T-1 selects exactly the last step's D columns straight from
        # HBM -- the other T-1 steps are never touched.
        x_in = x.reshape(B, T * D)
        x_col_block = T - 1
        Bt = B
    else:
        # Narrow-D / ragged-large-batch fallback: tiny (B, D) slice (still T x
        # less kernel DMA and compute than running the full sequence).
        x_in = x[:, -1, :]
        Bt = pl.cdiv(B, tb) * tb
        if Bt != B:
            x_in = jnp.pad(x_in, ((0, Bt - B), (0, 0)))
        x_col_block = 0

    # NOTE: if the strided last-step x DMA (D-wide segments, stride T*D) shows
    # exposed latency at small D, sweep pipeline_mode=pl.Buffered(3) on x_spec.
    x_spec = pl.BlockSpec((tb, D), lambda i: (i, x_col_block))

    # W / b never change across the grid -> constant index maps keep them
    # VMEM-resident; single-buffer them when supported (double-buffering a
    # grid-constant block is pure VMEM waste).
    if single_buffer_params:
        w_spec = pl.BlockSpec((D, Fp), lambda i: (0, 0),
                              pipeline_mode=pl.Buffered(1))
        b_spec = pl.BlockSpec((1, Fp), lambda i: (0, 0),
                              pipeline_mode=pl.Buffered(1))
    else:
        w_spec = pl.BlockSpec((D, Fp), lambda i: (0, 0))
        b_spec = pl.BlockSpec((1, Fp), lambda i: (0, 0))

    cost = pl.CostEstimate(
        flops=2 * Bt * D * Fp,
        transcendentals=0,
        bytes_accessed=(Bt * D * x_in.dtype.itemsize
                        + D * Fp * w_p.dtype.itemsize
                        + Fp * 4 + Bt * Fp * 4))

    out = pl.pallas_call(
        _last_step_linear_kernel,
        out_shape=jax.ShapeDtypeStruct((Bt, Fp), jnp.float32),
        grid=(Bt // tb,),
        in_specs=[x_spec, w_spec, b_spec],
        out_specs=pl.BlockSpec((tb, Fp), lambda i: (i, 0)),
        compiler_params=pltpu.CompilerParams(
            # Batch tiles are independent -> pipelined DMA and, on v7x,
            # sharding across both TensorCores.
            dimension_semantics=("parallel",),
            vmem_limit_bytes=vmem_limit),
        cost_estimate=cost,
    )(x_in, w_p, b_p)

    return out[:B, :F]


def last_step(x, w, b, *, tb=None):
    """LastStep(TimeDistributed(Linear(D->F)+ReLU))(x) == relu(x[:,-1,:] @ w + b)."""
    B, T, D = x.shape
    del T  # only used inside the jitted impl
    x_bytes = jnp.dtype(x.dtype).itemsize
    w_bytes = x_bytes                       # W is cast to x.dtype for the MXU
    sublane = _SUBLANE_BY_ITEMSIZE.get(x_bytes, 8)
    Fp = pl.cdiv(w.shape[1], _LANE) * _LANE

    vmem_limit = _vmem_limit_bytes()
    tile_cap = _vmem_feasible_tile_cap(D, Fp, x_bytes, w_bytes, sublane,
                                       budget=int(vmem_limit * 0.9))
    if tb is None:
        tb, needs_pad = _pick_batch_tile(B, sublane, tile_cap)
    else:
        if tb % sublane != 0 and tb != B:
            raise ValueError(
                f"tb={tb} must be a multiple of {sublane} (dtype {x.dtype}) "
                f"or equal the batch size {B}")
        needs_pad = (B % tb) != 0

    zero_copy = (D % _LANE == 0) and not needs_pad

    kwargs = dict(tb=tb, zero_copy=zero_copy, vmem_limit=vmem_limit)
    global _single_buffer_params_ok
    if _single_buffer_params_ok is None:
        try:
            out = _last_step_impl(x, w, b, single_buffer_params=True, **kwargs)
            _single_buffer_params_ok = True
            return out
        except Exception:
            # Older builds without pipeline_mode support on pallas_call specs.
            _single_buffer_params_ok = False
    return _last_step_impl(
        x, w, b, single_buffer_params=_single_buffer_params_ok, **kwargs)


def last_step_ref(x, w, b):
    # Pure-JAX reference of the wrapped module: featurizer(x)[:, -1, :]
    h = jnp.maximum(jnp.einsum("btd,df->btf", x, w) + b[None, None, :], 0.0)
    return h[:, -1, :]


if __name__ == "__main__":
    key = jax.random.PRNGKey(0)

    # Case 0: zero-copy BlockSpec last-step column select, f32, grid of 2 tiles.
    # Case 1: ragged batch + narrow D -> slice fallback with a single
    #         full-batch block (no padding needed).
    # Case 2: bf16 inputs (halved HBM bytes, f32 accumulation), larger batch
    #         tile (128 rows), zero-copy path, 2 grid tiles.
    cases = [
        (16, 8, 128, 16, jnp.float32),
        (12, 8, 32, 16, jnp.float32),
        (256, 4, 128, 16, jnp.bfloat16),
    ]
    for case, (B, T, D, F, dt) in enumerate(cases):
        kx, kw, kb = jax.random.split(jax.random.fold_in(key, case), 3)
        x = jax.random.normal(kx, (B, T, D), dtype=jnp.float32).astype(dt)
        # Deterministic featurizer parameters (Linear(d_in=D, n_outputs=F)).
        w = jax.random.normal(kw, (D, F), dtype=jnp.float32) * 0.1
        b = jax.random.normal(kb, (F,), dtype=jnp.float32) * 0.1

        out = jax.block_until_ready(last_step(x, w, b))
        ref = last_step_ref(x.astype(jnp.float32), w, b)
        tol = 1e-4 if dt == jnp.float32 else 2e-2
        assert out.shape == (B, F), (out.shape, (B, F))
        assert out.dtype == jnp.float32
        assert jnp.allclose(out, ref, atol=tol, rtol=tol), \
            f"mismatch vs reference (case {case})"

    print("KERNEL_OK")
</pallas_src>

<mosaic_0001>
module attributes {stable_mosaic.version = 11 : i64} {
  func.func @_last_step_linear_kernel(%arg0: i32, %arg1: memref<8x128xf32, #tpu.memory_space<vmem>>, %arg2: memref<128x128xf32, #tpu.memory_space<vmem>>, %arg3: memref<1x128xf32, #tpu.memory_space<vmem>>, %arg4: memref<8x128xf32, #tpu.memory_space<vmem>>) attributes {dimension_semantics = [#tpu.dimension_semantics<parallel>], iteration_bounds = array<i64: 2>, scalar_prefetch = 0 : i64, scratch_operands = 0 : i64, tpu.core_type = #tpu.core_type<tc>, window_params = [{transform_indices = @transform_0, window_bounds = array<i64: 8, 128>}, {pipeline_mode = #tpu.pipeline_mode<synchronous>, transform_indices = @transform_1, window_bounds = array<i64: 128, 128>}, {pipeline_mode = #tpu.pipeline_mode<synchronous>, transform_indices = @transform_2, window_bounds = array<i64: 1, 128>}, {transform_indices = @transform_3, window_bounds = array<i64: 8, 128>}]} {
    %c0 = arith.constant 0 : index
    %c0_0 = arith.constant 0 : index
    %0 = vector.load %arg1[%c0, %c0_0] : memref<8x128xf32, #tpu.memory_space<vmem>>, vector<8x128xf32>
    %c0_1 = arith.constant 0 : index
    %c0_2 = arith.constant 0 : index
    %1 = vector.load %arg2[%c0_1, %c0_2] : memref<128x128xf32, #tpu.memory_space<vmem>>, vector<128x128xf32>
    %cst = arith.constant dense<0.000000e+00> : vector<8x128xf32>
    %2 = tpu.matmul %0, %1, %cst {dimension_numbers = #tpu.dot_dimension_numbers<[1], [0], [0], [1], [0, 0, 1, 1], [], []>} : vector<8x128xf32>, vector<128x128xf32>, vector<8x128xf32> -> vector<8x128xf32>
    %c0_3 = arith.constant 0 : index
    %c0_4 = arith.constant 0 : index
    %3 = vector.load %arg3[%c0_3, %c0_4] : memref<1x128xf32, #tpu.memory_space<vmem>>, vector<1x128xf32>
    %4 = vector.broadcast %3 : vector<1x128xf32> to vector<8x128xf32>
    %5 = arith.addf %2, %4 : vector<8x128xf32>
    %cst_5 = arith.constant 0.000000e+00 : f32
    %6 = vector.broadcast %cst_5 : f32 to vector<8x128xf32>
    %7 = arith.maximumf %5, %6 : vector<8x128xf32>
    %c0_6 = arith.constant 0 : index
    %c0_7 = arith.constant 0 : index
    %8 = vector.load %arg4[%c0_6, %c0_7] : memref<8x128xf32, #tpu.memory_space<vmem>>, vector<8x128xf32>
    tpu.vector_store %arg4[%c0_6, %c0_7], %7 {strides = array<i32>} : memref<8x128xf32, #tpu.memory_space<vmem>>, vector<8x128xf32>,
    return
  }
  func.func @transform_0(%arg0: i32) -> (i32, i32) {
    %c7_i32 = arith.constant 7 : i32
    %c0_i32 = arith.constant 0 : i32
    return %arg0, %c7_i32 : i32, i32
  }
  func.func @transform_1(%arg0: i32) -> (i32, i32) {
    %c0_i32 = arith.constant 0 : i32
    %c0_i32_0 = arith.constant 0 : i32
    %c0_i32_1 = arith.constant 0 : i32
    return %c0_i32, %c0_i32_0 : i32, i32
  }
  func.func @transform_2(%arg0: i32) -> (i32, i32) {
    %c0_i32 = arith.constant 0 : i32
    %c0_i32_0 = arith.constant 0 : i32
    %c0_i32_1 = arith.constant 0 : i32
    return %c0_i32, %c0_i32_0 : i32, i32
  }
  func.func @transform_3(%arg0: i32) -> (i32, i32) {
    %c0_i32 = arith.constant 0 : i32
    %c0_i32_0 = arith.constant 0 : i32
    return %arg0, %c0_i32 : i32, i32
  }
}

module attributes {stable_mosaic.version = 11 : i64} {
  func.func @_last_step_linear_kernel(%arg0: i32, %arg1: memref<8x128xf32, #tpu.memory_space<vmem>>, %arg2: memref<128x128xf32, #tpu.memory_space<vmem>>, %arg3: memref<1x128xf32, #tpu.memory_space<vmem>>, %arg4: memref<8x128xf32, #tpu.memory_space<vmem>>) attributes {dimension_semantics = [#tpu.dimension_semantics<parallel>], iteration_bounds = array<i64: 2>, scalar_prefetch = 0 : i64, scratch_operands = 0 : i64, tpu.core_type = #tpu.core_type<tc>, window_params = [{transform_indices = @transform_0, window_bounds = array<i64: 8, 128>}, {pipeline_mode = #tpu.pipeline_mode<synchronous>, transform_indices = @transform_1, window_bounds = array<i64: 128, 128>}, {pipeline_mode = #tpu.pipeline_mode<synchronous>, transform_indices = @transform_2, window_bounds = array<i64: 1, 128>}, {transform_indices = @transform_3, window_bounds = array<i64: 8, 128>}]} {
    %c0 = arith.constant 0 : index
    %c0_0 = arith.constant 0 : index
    %0 = vector.load %arg1[%c0, %c0_0] : memref<8x128xf32, #tpu.memory_space<vmem>>, vector<8x128xf32>
    %c0_1 = arith.constant 0 : index
    %c0_2 = arith.constant 0 : index
    %1 = vector.load %arg2[%c0_1, %c0_2] : memref<128x128xf32, #tpu.memory_space<vmem>>, vector<128x128xf32>
    %cst = arith.constant dense<0.000000e+00> : vector<8x128xf32>
    %2 = tpu.matmul %0, %1, %cst {dimension_numbers = #tpu.dot_dimension_numbers<[1], [0], [0], [1], [0, 0, 1, 1], [], []>} : vector<8x128xf32>, vector<128x128xf32>, vector<8x128xf32> -> vector<8x128xf32>
    %c0_3 = arith.constant 0 : index
    %c0_4 = arith.constant 0 : index
    %3 = vector.load %arg3[%c0_3, %c0_4] : memref<1x128xf32, #tpu.memory_space<vmem>>, vector<1x128xf32>
    %4 = vector.broadcast %3 : vector<1x128xf32> to vector<8x128xf32>
    %5 = arith.addf %2, %4 : vector<8x128xf32>
    %cst_5 = arith.constant 0.000000e+00 : f32
    %6 = vector.broadcast %cst_5 : f32 to vector<8x128xf32>
    %7 = arith.maximumf %5, %6 : vector<8x128xf32>
    %c0_6 = arith.constant 0 : index
    %c0_7 = arith.constant 0 : index
    %8 = vector.load %arg4[%c0_6, %c0_7] : memref<8x128xf32, #tpu.memory_space<vmem>>, vector<8x128xf32>
    tpu.vector_store %arg4[%c0_6, %c0_7], %7 {strides = array<i32>} : memref<8x128xf32, #tpu.memory_space<vmem>>, vector<8x128xf32>,
    return
  }
  func.func @transform_0(%arg0: i32) -> (i32, i32) {
    %c7_i32 = arith.constant 7 : i32
    %c0_i32 = arith.constant 0 : i32
    return %arg0, %c7_i32 : i32, i32
  }
  func.func @transform_1(%arg0: i32) -> (i32, i32) {
    %c0_i32 = arith.constant 0 : i32
    %c0_i32_0 = arith.constant 0 : i32
    %c0_i32_1 = arith.constant 0 : i32
    return %c0_i32, %c0_i32_0 : i32, i32
  }
  func.func @transform_2(%arg0: i32) -> (i32, i32) {
    %c0_i32 = arith.constant 0 : i32
    %c0_i32_0 = arith.constant 0 : i32
    %c0_i32_1 = arith.constant 0 : i32
    return %c0_i32, %c0_i32_0 : i32, i32
  }
  func.func @transform_3(%arg0: i32) -> (i32, i32) {
    %c0_i32 = arith.constant 0 : i32
    %c0_i32_0 = arith.constant 0 : i32
    return %arg0, %c0_i32 : i32, i32
  }
}

</mosaic_0001>

<llo_original>
// kernel: _last_step_impl.1
$region0: #{_last_step_impl.1}
  #allocation0 [shape = 'u32[]', space=smem, size = 0x4, offset = 0x4, fixed_abs, tag = 'smem constant byte address 0x4 - core index']
  #allocation1 [shape = 'u32[144,128]{1,0:T(1,128)}', space=vmem, size = 0x12000, scoped, tag = 'internal scratch']
  %s0 = inlined_call_operand.vmem [shape: f32[16,1024], index: 0, kind: input, shape index: {}]
  %s1 = inlined_call_operand.vmem [shape: f32[128,128], index: 1, kind: input, shape index: {}]
  %s2 = inlined_call_operand.vmem [shape: f32[1,128], index: 2, kind: input, shape index: {}]
  %s3 = inlined_call_operand.hbm [shape: f32[16,128], index: 3, kind: output, shape index: {}]
  %s4 = sld [smem:[#allocation0]]
  $region45: #{_last_step_impl.1} parent=0
    _
  %s6 = ssub.s32 1, %s4
  %s7 = scalar_select 0, %s6, %s4
  $region1: #{_last_step_impl.1} parent=0
    #allocation2 [shape = 'u8[8192]{0}', space=vmem, size = 0x2000, scoped, tag = 'output window, operand 0']
    #allocation3 [shape = 's32[2]{0}', space=sflag, size = 0x8, scoped, tag = 'scoped memory for _last_step_impl.1']
    %8 = vsyncpa [#allocation3], 0
    %s9 = scalar_lea.sflag [#allocation3], 1
    %10 = vsyncpa %s9, 0
    loop: start=0, step=1, limit=4
    $region2: #{_last_step_impl.1} parent=1 // loop_pre_header
      _
    $region3: #{_last_step_impl.1} parent=1 // loop_header
      %s12 = sphi 0, %s16
      %p13 = scmp.ge.s32.totalorder %s12, 4
      %s22 = sphi 0, %s24
      %s25 = sphi 0, %s22
      %s26 = sphi 0, %s25
      %s42 = sphi 0, %s26
      %s46 = sphi 0, %s46
      %s48 = sphi 0, %s46
      %s49 = sphi 0, %s48
      %s63 = sphi 0, %s49
      %s67 = sphi 0, %s67
      %s69 = sphi 0, %s67
      %s70 = sphi 0, %s69
      %s84 = sphi 0, %s70
      %s90 = sphi 0, %s92
      %s93 = sphi 0, %s90
      %s94 = sphi 0, %s93
      %s110 = sphi 0, %s94
    $region4: #{_last_step_impl.1} parent=1 // loop_header_branch
      %15 = sbr.rel (%p13) target = $region8
    $region5: #{_last_step_impl.1} parent=1 // loop_body
      %s17 = ssub.s32 %s12, 1
      %s18 = ssub.s32 %s12, 2
      %s19 = sadd.s32 %s12, 1
      %s20 = ssub.s32 %s12, %s19
      %p21 = scmp.eq.s32.totalorder %s20, 0
      %s23 = sadd.s32 %s22, 1
      %s24 = scalar_select %p21, %s22, %s23
      %p27 = pneg %p21
      %p28 = scmp.eq.s32.totalorder %s12, 1
      %p29 = por %p27, %p28
      %p30 = scmp.ne.s32.totalorder %s22, %s25
      %p31 = scmp.eq.s32.totalorder %s12, 0
      %p32 = por %p30, %p31
      %p33 = scmp.ne.s32.totalorder %s22, %s25
      %p34 = scmp.eq.s32.totalorder %s17, 1
      %p35 = por %p33, %p34
      %p36 = scmp.ne.s32.totalorder %s25, %s26
      %p37 = scmp.eq.s32.totalorder %s17, 0
      %p38 = por %p36, %p37
      %p39 = scmp.ne.s32.totalorder %s25, %s26
      %p40 = scmp.eq.s32.totalorder %s18, 1
      %p41 = por %p39, %p40
      %p43 = scmp.ne.s32.totalorder %s26, %s42
      %p44 = scmp.eq.s32.totalorder %s18, 0
      %p45 = por %p43, %p44
      %s47 = sadd.s32 %s46, 1
      %p50 = scmp.eq.s32.totalorder %s12, 1
      %p51 = scmp.ne.s32.totalorder %s46, %s48
      %p52 = scmp.eq.s32.totalorder %s12, 0
      %p53 = por %p51, %p52
      %p54 = scmp.ne.s32.totalorder %s46, %s48
      %p55 = scmp.eq.s32.totalorder %s17, 1
      %p56 = por %p54, %p55
      %p57 = scmp.ne.s32.totalorder %s48, %s49
      %p58 = scmp.eq.s32.totalorder %s17, 0
      %p59 = por %p57, %p58
      %p60 = scmp.ne.s32.totalorder %s48, %s49
      %p61 = scmp.eq.s32.totalorder %s18, 1
      %p62 = por %p60, %p61
      %p64 = scmp.ne.s32.totalorder %s49, %s63
      %p65 = scmp.eq.s32.totalorder %s18, 0
      %p66 = por %p64, %p65
      %s68 = sadd.s32 %s67, 1
      %p71 = scmp.eq.s32.totalorder %s12, 1
      %p72 = scmp.ne.s32.totalorder %s67, %s69
      %p73 = scmp.eq.s32.totalorder %s12, 0
      %p74 = por %p72, %p73
      %p75 = scmp.ne.s32.totalorder %s67, %s69
      %p76 = scmp.eq.s32.totalorder %s17, 1
      %p77 = por %p75, %p76
      %p78 = scmp.ne.s32.totalorder %s69, %s70
      %p79 = scmp.eq.s32.totalorder %s17, 0
      %p80 = por %p78, %p79
      %p81 = scmp.ne.s32.totalorder %s69, %s70
      %p82 = scmp.eq.s32.totalorder %s18, 1
      %p83 = por %p81, %p82
      %p85 = scmp.ne.s32.totalorder %s70, %s84
      %p86 = scmp.eq.s32.totalorder %s18, 0
      %p87 = por %p85, %p86
      %s88 = ssub.s32 %s12, %s19
      %p89 = scmp.eq.s32.totalorder %s88, 0
      %s91 = sadd.s32 %s90, 1
      %s92 = scalar_select %p89, %s90, %s91
      %p95 = pneg %p89
      %p96 = scmp.eq.s32.totalorder %s12, 1
      %p97 = por %p95, %p96
      %p98 = scmp.ne.s32.totalorder %s90, %s93
      %p99 = scmp.eq.s32.totalorder %s12, 0
      %p100 = por %p98, %p99
      %p101 = scmp.ne.s32.totalorder %s90, %s93
      %p102 = scmp.eq.s32.totalorder %s17, 1
      %p103 = por %p101, %p102
      %p104 = scmp.ne.s32.totalorder %s93, %s94
      %p105 = scmp.eq.s32.totalorder %s17, 0
      %p106 = por %p104, %p105
      %p107 = scmp.ne.s32.totalorder %s93, %s94
      %p108 = scmp.eq.s32.totalorder %s18, 1
      %p109 = por %p107, %p108
      %p111 = scmp.ne.s32.totalorder %s94, %s110
      %p112 = scmp.eq.s32.totalorder %s18, 0
      %p113 = por %p111, %p112
      %p114 = scmp.le.s32.totalorder 1, %s12
      %p115 = scmp.lt.s32.totalorder %s12, 3
      %p116 = pnand %p114, %p115
      %p117 = pneg %p116
      // Predicated region
      $region9: #{_last_step_impl.1} parent=5 // pred_check
        _
      $region10: #{_last_step_impl.1} parent=5 // pred_check_branch
        %119 = sbr.rel (%p116) target = $region12
      $region11: #{_last_step_impl.1} parent=5 // pred_region
        %s120 = ssub.s32 %s12, 1
        // Predicated region
        $region13: #{_last_step_impl.1} parent=11 // pred_check
          %p121 = pneg %p59
        $region14: #{_last_step_impl.1} parent=11 // pred_check_branch
          %123 = sbr.rel (%p121) target = $region16
        $region15: #{_last_step_impl.1} parent=11 // pred_region
          _
        $region16: #{_last_step_impl.1} parent=11 // pred_fallthru
          _
        // Predicated region
        $region17: #{_last_step_impl.1} parent=11 // pred_check
          %p124 = pneg %p80
        $region18: #{_last_step_impl.1} parent=11 // pred_check_branch
          %126 = sbr.rel (%p124) target = $region20
        $region19: #{_last_step_impl.1} parent=11 // pred_region
          _
        $region20: #{_last_step_impl.1} parent=11 // pred_fallthru
          _
      $region12: #{_last_step_impl.1} parent=5 // pred_fallthru
        _
      %p127 = scmp.lt.s32.totalorder %s12, 2
      // Predicated region
      $region21: #{_last_step_impl.1} parent=5 // pred_check
        %p128 = pneg %p127
      $region22: #{_last_step_impl.1} parent=5 // pred_check_branch
        %130 = sbr.rel (%p128) target = $region24
      $region23: #{_last_step_impl.1} parent=5 // pred_region
        // Predicated region
        $region25: #{_last_step_impl.1} parent=23 // pred_check
          %p131 = pneg %p32
        $region26: #{_last_step_impl.1} parent=23 // pred_check_branch
          %133 = sbr.rel (%p131) target = $region28
        $region27: #{_last_step_impl.1} parent=23 // pred_region
          %p134 = scmp.lt.s32.totalorder %s12, 1
          %s135 = scalar_select %p134, %s12, 1
          %s136 = smul.addr %s135, 8
          %s137 = sadd.s32 7, %s136
          %s138 = smul.addr %s137, 8
          %s139 = scalar_lea.vmem %s0, %s138
        $region28: #{_last_step_impl.1} parent=23 // pred_fallthru
          _
      $region24: #{_last_step_impl.1} parent=5 // pred_fallthru
        _
      %p140 = scmp.le.s32.totalorder 1, %s12
      %p141 = scmp.lt.s32.totalorder %s12, 3
      %p142 = pnand %p140, %p141
      %p143 = pneg %p142
      // Predicated region
      $region29: #{_last_step_impl.1} parent=5 // pred_check
        _
      $region30: #{_last_step_impl.1} parent=5 // pred_check_branch
        %145 = sbr.rel (%p142) target = $region32
      $region31: #{_last_step_impl.1} parent=5 // pred_region
        %s146 = ssub.s32 %s12, 1
        %p147 = scmp.lt.s32.totalorder %s17, 1
        %s148 = scalar_select %p147, %s17, 1
        %s149 = smul.addr %s148, 8
        %s150 = sadd.s32 7, %s149
        %s151 = smul.addr %s150, 8
        %s152 = scalar_lea.vmem %s0, %s151
        %p153 = pneg %p38
        %p154 = pneg %p35
        %p155 = pneg %p59
        %p156 = pneg %p56
        %p157 = pneg %p80
        %p158 = pneg %p77
        %p159 = pneg %p106
        %p160 = pneg %p103
        %s161 = sand.u32 %s93, 1
        %s162 = scalar_lea.sflag [#allocation3], %s161
        %s163 = sand.u32 %s93, 1
        %s164 = smul.addr %s163, 8
        %s165 = scalar_lea.vmem [#allocation2], %s164
        %p166 = scmp.lt.s32.totalorder %s17, 1
        %s167 = scalar_select %p166, %s17, 1
        %s168 = smul.addr %s167, 8
        %s169 = sadd.s32 7, %s168
        %s170 = smul.addr %s169, 8
        %s171 = scalar_lea.vmem %s0, %s170
        %v172 = vld [vmem:[%s171] sm:$0xff]
        %v173 = vld [vmem:[%s1] sm:$0xff]
        %v174 = vld [vmem:[%s1 + $0x8] sm:$0xff]
        %v175 = vld [vmem:[%s1 + $0x10] sm:$0xff]
        %v176 = vld [vmem:[%s1 + $0x18] sm:$0xff]
        %v177 = vld [vmem:[%s1 + $0x20] sm:$0xff]
        %v178 = vld [vmem:[%s1 + $0x28] sm:$0xff]
        %v179 = vld [vmem:[%s1 + $0x30] sm:$0xff]
        %v180 = vld [vmem:[%s1 + $0x38] sm:$0xff]
        %v181 = vld [vmem:[%s1 + $0x40] sm:$0xff]
        %v182 = vld [vmem:[%s1 + $0x48] sm:$0xff]
        %v183 = vld [vmem:[%s1 + $0x50] sm:$0xff]
        %v184 = vld [vmem:[%s1 + $0x58] sm:$0xff]
        %v185 = vld [vmem:[%s1 + $0x60] sm:$0xff]
        %v186 = vld [vmem:[%s1 + $0x68] sm:$0xff]
        %v187 = vld [vmem:[%s1 + $0x70] sm:$0xff]
        %v188 = vld [vmem:[%s1 + $0x78] sm:$0xff]
        %v189 = vld [vmem:[%s2] sm:$0x1]
        %v191 = vlaneseq
        %v192 = vshrl.u32 %v191, 7
        %v193 = vsub.s32 0, %v192
        %v194 = vrot.slane %v189, %v193
        %196 = vmatprep.subr.mxu0 0.0
        %197 = vmatpush1.msra.mxu0 %v188
        %198 = vmatprep.subr.mxu0 0.0
        %199 = vmatpush1.msra.mxu0 %v187
        %200 = vmatprep.subr.mxu0 0.0
        %201 = vmatpush1.msra.mxu0 %v186
        %202 = vmatprep.subr.mxu0 0.0
        %203 = vmatpush1.msra.mxu0 %v185
        %204 = vmatprep.subr.mxu0 0.0
        %205 = vmatpush1.msra.mxu0 %v184
        %206 = vmatprep.subr.mxu0 0.0
        %207 = vmatpush1.msra.mxu0 %v183
        %208 = vmatprep.subr.mxu0 0.0
        %209 = vmatpush1.msra.mxu0 %v182
        %210 = vmatprep.subr.mxu0 0.0
        %211 = vmatpush1.msra.mxu0 %v181
        %212 = vmatprep.subr.mxu0 0.0
        %213 = vmatpush1.msra.mxu0 %v180
        %214 = vmatprep.subr.mxu0 0.0
        %215 = vmatpush1.msra.mxu0 %v179
        %216 = vmatprep.subr.mxu0 0.0
        %217 = vmatpush1.msra.mxu0 %v178
        %218 = vmatprep.subr.mxu0 0.0
        %219 = vmatpush1.msra.mxu0 %v177
        %220 = vmatprep.subr.mxu0 0.0
        %221 = vmatpush1.msra.mxu0 %v176
        %222 = vmatprep.subr.mxu0 0.0
        %223 = vmatpush1.msra.mxu0 %v175
        %224 = vmatprep.subr.mxu0 0.0
        %225 = vmatpush1.msra.mxu0 %v174
        %226 = vmatprep.subr.mxu0 0.0
        %227 = vmatpush1.msra.mxu0 %v173
        %228 = vmatprep.subr.mxu0 0.0
        %229 = vmatpush2.msra.mxu0 0.0
        %230 = vmatprep.subr.mxu0 0.0
        %231 = vmatpush2.msra.mxu0 0.0
        %232 = vmatprep.subr.mxu0 0.0
        %233 = vmatpush2.msra.mxu0 0.0
        %234 = vmatprep.subr.mxu0 0.0
        %235 = vmatpush2.msra.mxu0 0.0
        %236 = vmatprep.subr.mxu0 0.0
        %237 = vmatpush2.msra.mxu0 0.0
        %238 = vmatprep.subr.mxu0 0.0
        %239 = vmatpush2.msra.mxu0 0.0
        %240 = vmatprep.subr.mxu0 0.0
        %241 = vmatpush2.msra.mxu0 0.0
        %242 = vmatprep.subr.mxu0 0.0
        %243 = vmatpush2.msra.mxu0 0.0
        %244 = vmatprep.subr.mxu0 0.0
        %245 = vmatpush2.msra.mxu0 0.0
        %246 = vmatprep.subr.mxu0 0.0
        %247 = vmatpush2.msra.mxu0 0.0
        %248 = vmatprep.subr.mxu0 0.0
        %249 = vmatpush2.msra.mxu0 0.0
        %250 = vmatprep.subr.mxu0 0.0
        %251 = vmatpush2.msra.mxu0 0.0
        %252 = vmatprep.subr.mxu0 0.0
        %253 = vmatpush2.msra.mxu0 0.0
        %254 = vmatprep.subr.mxu0 0.0
        %255 = vmatpush2.msra.mxu0 0.0
        %256 = vmatprep.subr.mxu0 0.0
        %257 = vmatpush2.msra.mxu0 0.0
        %258 = vmatprep.subr.mxu0 0.0
        %259 = vmatpush2.msra.mxu0 0.0
        %260 = vmatprep.mubr.f32.mxu0 0.0
        %261 = vmatmul.mubr.f32.gmra.mxu0 %v172
        %v262 = vpop.f32.mrf.mxu0
        %v263 = vadd.f32 %v194, %v262
        %v264 = vpop.f32.mrf.mxu0
        %265 = vdwg.mxu0
        %v266 = vmax.f32 %v263, 0.0
        %267 = vst [vmem:[%s165] sm:$0xff] %v266
        %s268 = sand.u32 %s93, 1
        %s269 = scalar_lea.sflag [#allocation3], %s268
        %s270 = sand.u32 %s93, 1
        %s271 = smul.addr %s270, 8
        %s272 = scalar_lea.vmem [#allocation2], %s271
        // Predicated region
        $region33: #{_last_step_impl.1} parent=31 // pred_check
          %p273 = pneg %p103
        $region34: #{_last_step_impl.1} parent=31 // pred_check_branch
          %275 = sbr.rel (%p273) target = $region36
        $region35: #{_last_step_impl.1} parent=31 // pred_region
          %s277 = ssub.s32 128, 128
          %278 = vsyncadd %s269, %s277
          %s279 = smul.addr %s17, 128
          %s280 = scalar_lea.hbm %s3, %s279
          %s282 = sshll.u32 %s272, 4
          %s283 = int_to_ptr.vmem [resolvable:$true] %s282
          %285 = dma.vmem_to_hbm [thread:$0]  %s283, 128, %s280, %s269
        $region36: #{_last_step_impl.1} parent=31 // pred_fallthru
          _
      $region32: #{_last_step_impl.1} parent=5 // pred_fallthru
        _
      %p286 = scmp.le.s32.totalorder 2, %s12
      // Predicated region
      $region37: #{_last_step_impl.1} parent=5 // pred_check
        %p287 = pneg %p286
      $region38: #{_last_step_impl.1} parent=5 // pred_check_branch
        %289 = sbr.rel (%p287) target = $region40
      $region39: #{_last_step_impl.1} parent=5 // pred_region
        %s290 = ssub.s32 %s12, 2
        // Predicated region
        $region41: #{_last_step_impl.1} parent=39 // pred_check
          %p291 = pneg %p109
        $region42: #{_last_step_impl.1} parent=39 // pred_check_branch
          %293 = sbr.rel (%p291) target = $region44
        $region43: #{_last_step_impl.1} parent=39 // pred_region
          %s294 = sand.u32 %s94, 1
          %s295 = scalar_lea.sflag [#allocation3], %s294
          %s296 = sand.u32 %s94, 1
          %s297 = smul.addr %s296, 8
          %s298 = scalar_lea.vmem [#allocation2], %s297
          %299 = dma.done %s295, 128
        $region44: #{_last_step_impl.1} parent=39 // pred_fallthru
          _
      $region40: #{_last_step_impl.1} parent=5 // pred_fallthru
        _
    $region6: #{_last_step_impl.1} parent=1 // loop_footer
      %s16 = sadd.s32 1, %s12
    $region7: #{_last_step_impl.1} parent=1 // loop_footer_branch
      %11 = sbr.rel target = $region3
    $region8: #{_last_step_impl.1} parent=1 // loop_exit
      _
    %300 = vsyncpa [#allocation3], 1
    %s301 = scalar_lea.sflag [#allocation3], 1
    %302 = vsyncpa %s301, 1

// kernel: _last_step_impl.1
$region0: #{_last_step_impl.1}
  #allocation0 [shape = 'u32[]', space=smem, size = 0x4, offset = 0x4, fixed_abs, tag = 'smem constant byte address 0x4 - core index']
  #allocation1 [shape = 'u32[144,128]{1,0:T(1,128)}', space=vmem, size = 0x12000, scoped, tag = 'internal scratch']
  %s0 = inlined_call_operand.vmem [shape: f32[16,1024], index: 0, kind: input, shape index: {}]
  %s1 = inlined_call_operand.vmem [shape: f32[128,128], index: 1, kind: input, shape index: {}]
  %s2 = inlined_call_operand.vmem [shape: f32[1,128], index: 2, kind: input, shape index: {}]
  %s3 = inlined_call_operand.hbm [shape: f32[16,128], index: 3, kind: output, shape index: {}]
  %s4 = sld [smem:[#allocation0]]
  $region45: #{_last_step_impl.1} parent=0
    _
  %s6 = ssub.s32 1, %s4
  %s7 = scalar_select 0, %s6, %s4
  $region1: #{_last_step_impl.1} parent=0
    #allocation2 [shape = 'u8[8192]{0}', space=vmem, size = 0x2000, scoped, tag = 'output window, operand 0']
    #allocation3 [shape = 's32[2]{0}', space=sflag, size = 0x8, scoped, tag = 'scoped memory for _last_step_impl.1']
    %8 = vsyncpa [#allocation3], 0
    %s9 = scalar_lea.sflag [#allocation3], 1
    %10 = vsyncpa %s9, 0
    loop: start=0, step=1, limit=4
    $region2: #{_last_step_impl.1} parent=1 // loop_pre_header
      _
    $region3: #{_last_step_impl.1} parent=1 // loop_header
      %s12 = sphi 0, %s16
      %p13 = scmp.ge.s32.totalorder %s12, 4
      %s22 = sphi 0, %s24
      %s25 = sphi 0, %s22
      %s26 = sphi 0, %s25
      %s42 = sphi 0, %s26
      %s46 = sphi 0, %s46
      %s48 = sphi 0, %s46
      %s49 = sphi 0, %s48
      %s63 = sphi 0, %s49
      %s67 = sphi 0, %s67
      %s69 = sphi 0, %s67
      %s70 = sphi 0, %s69
      %s84 = sphi 0, %s70
      %s90 = sphi 0, %s92
      %s93 = sphi 0, %s90
      %s94 = sphi 0, %s93
      %s110 = sphi 0, %s94
    $region4: #{_last_step_impl.1} parent=1 // loop_header_branch
      %15 = sbr.rel (%p13) target = $region8
    $region5: #{_last_step_impl.1} parent=1 // loop_body
      %s17 = ssub.s32 %s12, 1
      %s18 = ssub.s32 %s12, 2
      %s19 = sadd.s32 %s12, 1
      %s20 = ssub.s32 %s12, %s19
      %p21 = scmp.eq.s32.totalorder %s20, 0
      %s23 = sadd.s32 %s22, 1
      %s24 = scalar_select %p21, %s22, %s23
      %p27 = pneg %p21
      %p28 = scmp.eq.s32.totalorder %s12, 1
      %p29 = por %p27, %p28
      %p30 = scmp.ne.s32.totalorder %s22, %s25
      %p31 = scmp.eq.s32.totalorder %s12, 0
      %p32 = por %p30, %p31
      %p33 = scmp.ne.s32.totalorder %s22, %s25
      %p34 = scmp.eq.s32.totalorder %s17, 1
      %p35 = por %p33, %p34
      %p36 = scmp.ne.s32.totalorder %s25, %s26
      %p37 = scmp.eq.s32.totalorder %s17, 0
      %p38 = por %p36, %p37
      %p39 = scmp.ne.s32.totalorder %s25, %s26
      %p40 = scmp.eq.s32.totalorder %s18, 1
      %p41 = por %p39, %p40
      %p43 = scmp.ne.s32.totalorder %s26, %s42
      %p44 = scmp.eq.s32.totalorder %s18, 0
      %p45 = por %p43, %p44
      %s47 = sadd.s32 %s46, 1
      %p50 = scmp.eq.s32.totalorder %s12, 1
      %p51 = scmp.ne.s32.totalorder %s46, %s48
      %p52 = scmp.eq.s32.totalorder %s12, 0
      %p53 = por %p51, %p52
      %p54 = scmp.ne.s32.totalorder %s46, %s48
      %p55 = scmp.eq.s32.totalorder %s17, 1
      %p56 = por %p54, %p55
      %p57 = scmp.ne.s32.totalorder %s48, %s49
      %p58 = scmp.eq.s32.totalorder %s17, 0
      %p59 = por %p57, %p58
      %p60 = scmp.ne.s32.totalorder %s48, %s49
      %p61 = scmp.eq.s32.totalorder %s18, 1
      %p62 = por %p60, %p61
      %p64 = scmp.ne.s32.totalorder %s49, %s63
      %p65 = scmp.eq.s32.totalorder %s18, 0
      %p66 = por %p64, %p65
      %s68 = sadd.s32 %s67, 1
      %p71 = scmp.eq.s32.totalorder %s12, 1
      %p72 = scmp.ne.s32.totalorder %s67, %s69
      %p73 = scmp.eq.s32.totalorder %s12, 0
      %p74 = por %p72, %p73
      %p75 = scmp.ne.s32.totalorder %s67, %s69
      %p76 = scmp.eq.s32.totalorder %s17, 1
      %p77 = por %p75, %p76
      %p78 = scmp.ne.s32.totalorder %s69, %s70
      %p79 = scmp.eq.s32.totalorder %s17, 0
      %p80 = por %p78, %p79
      %p81 = scmp.ne.s32.totalorder %s69, %s70
      %p82 = scmp.eq.s32.totalorder %s18, 1
      %p83 = por %p81, %p82
      %p85 = scmp.ne.s32.totalorder %s70, %s84
      %p86 = scmp.eq.s32.totalorder %s18, 0
      %p87 = por %p85, %p86
      %s88 = ssub.s32 %s12, %s19
      %p89 = scmp.eq.s32.totalorder %s88, 0
      %s91 = sadd.s32 %s90, 1
      %s92 = scalar_select %p89, %s90, %s91
      %p95 = pneg %p89
      %p96 = scmp.eq.s32.totalorder %s12, 1
      %p97 = por %p95, %p96
      %p98 = scmp.ne.s32.totalorder %s90, %s93
      %p99 = scmp.eq.s32.totalorder %s12, 0
      %p100 = por %p98, %p99
      %p101 = scmp.ne.s32.totalorder %s90, %s93
      %p102 = scmp.eq.s32.totalorder %s17, 1
      %p103 = por %p101, %p102
      %p104 = scmp.ne.s32.totalorder %s93, %s94
      %p105 = scmp.eq.s32.totalorder %s17, 0
      %p106 = por %p104, %p105
      %p107 = scmp.ne.s32.totalorder %s93, %s94
      %p108 = scmp.eq.s32.totalorder %s18, 1
      %p109 = por %p107, %p108
      %p111 = scmp.ne.s32.totalorder %s94, %s110
      %p112 = scmp.eq.s32.totalorder %s18, 0
      %p113 = por %p111, %p112
      %p114 = scmp.le.s32.totalorder 1, %s12
      %p115 = scmp.lt.s32.totalorder %s12, 3
      %p116 = pnand %p114, %p115
      %p117 = pneg %p116
      // Predicated region
      $region9: #{_last_step_impl.1} parent=5 // pred_check
        _
      $region10: #{_last_step_impl.1} parent=5 // pred_check_branch
        %119 = sbr.rel (%p116) target = $region12
      $region11: #{_last_step_impl.1} parent=5 // pred_region
        %s120 = ssub.s32 %s12, 1
        // Predicated region
        $region13: #{_last_step_impl.1} parent=11 // pred_check
          %p121 = pneg %p59
        $region14: #{_last_step_impl.1} parent=11 // pred_check_branch
          %123 = sbr.rel (%p121) target = $region16
        $region15: #{_last_step_impl.1} parent=11 // pred_region
          _
        $region16: #{_last_step_impl.1} parent=11 // pred_fallthru
          _
        // Predicated region
        $region17: #{_last_step_impl.1} parent=11 // pred_check
          %p124 = pneg %p80
        $region18: #{_last_step_impl.1} parent=11 // pred_check_branch
          %126 = sbr.rel (%p124) target = $region20
        $region19: #{_last_step_impl.1} parent=11 // pred_region
          _
        $region20: #{_last_step_impl.1} parent=11 // pred_fallthru
          _
      $region12: #{_last_step_impl.1} parent=5 // pred_fallthru
        _
      %p127 = scmp.lt.s32.totalorder %s12, 2
      // Predicated region
      $region21: #{_last_step_impl.1} parent=5 // pred_check
        %p128 = pneg %p127
      $region22: #{_last_step_impl.1} parent=5 // pred_check_branch
        %130 = sbr.rel (%p128) target = $region24
      $region23: #{_last_step_impl.1} parent=5 // pred_region
        // Predicated region
        $region25: #{_last_step_impl.1} parent=23 // pred_check
          %p131 = pneg %p32
        $region26: #{_last_step_impl.1} parent=23 // pred_check_branch
          %133 = sbr.rel (%p131) target = $region28
        $region27: #{_last_step_impl.1} parent=23 // pred_region
          %p134 = scmp.lt.s32.totalorder %s12, 1
          %s135 = scalar_select %p134, %s12, 1
          %s136 = smul.addr %s135, 8
          %s137 = sadd.s32 7, %s136
          %s138 = smul.addr %s137, 8
          %s139 = scalar_lea.vmem %s0, %s138
        $region28: #{_last_step_impl.1} parent=23 // pred_fallthru
          _
      $region24: #{_last_step_impl.1} parent=5 // pred_fallthru
        _
      %p140 = scmp.le.s32.totalorder 1, %s12
      %p141 = scmp.lt.s32.totalorder %s12, 3
      %p142 = pnand %p140, %p141
      %p143 = pneg %p142
      // Predicated region
      $region29: #{_last_step_impl.1} parent=5 // pred_check
        _
      $region30: #{_last_step_impl.1} parent=5 // pred_check_branch
        %145 = sbr.rel (%p142) target = $region32
      $region31: #{_last_step_impl.1} parent=5 // pred_region
        %s146 = ssub.s32 %s12, 1
        %p147 = scmp.lt.s32.totalorder %s17, 1
        %s148 = scalar_select %p147, %s17, 1
        %s149 = smul.addr %s148, 8
        %s150 = sadd.s32 7, %s149
        %s151 = smul.addr %s150, 8
        %s152 = scalar_lea.vmem %s0, %s151
        %p153 = pneg %p38
        %p154 = pneg %p35
        %p155 = pneg %p59
        %p156 = pneg %p56
        %p157 = pneg %p80
        %p158 = pneg %p77
        %p159 = pneg %p106
        %p160 = pneg %p103
        %s161 = sand.u32 %s93, 1
        %s162 = scalar_lea.sflag [#allocation3], %s161
        %s163 = sand.u32 %s93, 1
        %s164 = smul.addr %s163, 8
        %s165 = scalar_lea.vmem [#allocation2], %s164
        %p166 = scmp.lt.s32.totalorder %s17, 1
        %s167 = scalar_select %p166, %s17, 1
        %s168 = smul.addr %s167, 8
        %s169 = sadd.s32 7, %s168
        %s170 = smul.addr %s169, 8
        %s171 = scalar_lea.vmem %s0, %s170
        %v172 = vld [vmem:[%s171] sm:$0xff]
        %v173 = vld [vmem:[%s1] sm:$0xff]
        %v174 = vld [vmem:[%s1 + $0x8] sm:$0xff]
        %v175 = vld [vmem:[%s1 + $0x10] sm:$0xff]
        %v176 = vld [vmem:[%s1 + $0x18] sm:$0xff]
        %v177 = vld [vmem:[%s1 + $0x20] sm:$0xff]
        %v178 = vld [vmem:[%s1 + $0x28] sm:$0xff]
        %v179 = vld [vmem:[%s1 + $0x30] sm:$0xff]
        %v180 = vld [vmem:[%s1 + $0x38] sm:$0xff]
        %v181 = vld [vmem:[%s1 + $0x40] sm:$0xff]
        %v182 = vld [vmem:[%s1 + $0x48] sm:$0xff]
        %v183 = vld [vmem:[%s1 + $0x50] sm:$0xff]
        %v184 = vld [vmem:[%s1 + $0x58] sm:$0xff]
        %v185 = vld [vmem:[%s1 + $0x60] sm:$0xff]
        %v186 = vld [vmem:[%s1 + $0x68] sm:$0xff]
        %v187 = vld [vmem:[%s1 + $0x70] sm:$0xff]
        %v188 = vld [vmem:[%s1 + $0x78] sm:$0xff]
        %v189 = vld [vmem:[%s2] sm:$0x1]
        %v191 = vlaneseq
        %v192 = vshrl.u32 %v191, 7
        %v193 = vsub.s32 0, %v192
        %v194 = vrot.slane %v189, %v193
        %196 = vmatprep.subr.mxu0 0.0
        %197 = vmatpush1.msra.mxu0 %v188
        %198 = vmatprep.subr.mxu0 0.0
        %199 = vmatpush1.msra.mxu0 %v187
        %200 = vmatprep.subr.mxu0 0.0
        %201 = vmatpush1.msra.mxu0 %v186
        %202 = vmatprep.subr.mxu0 0.0
        %203 = vmatpush1.msra.mxu0 %v185
        %204 = vmatprep.subr.mxu0 0.0
        %205 = vmatpush1.msra.mxu0 %v184
        %206 = vmatprep.subr.mxu0 0.0
        %207 = vmatpush1.msra.mxu0 %v183
        %208 = vmatprep.subr.mxu0 0.0
        %209 = vmatpush1.msra.mxu0 %v182
        %210 = vmatprep.subr.mxu0 0.0
        %211 = vmatpush1.msra.mxu0 %v181
        %212 = vmatprep.subr.mxu0 0.0
        %213 = vmatpush1.msra.mxu0 %v180
        %214 = vmatprep.subr.mxu0 0.0
        %215 = vmatpush1.msra.mxu0 %v179
        %216 = vmatprep.subr.mxu0 0.0
        %217 = vmatpush1.msra.mxu0 %v178
        %218 = vmatprep.subr.mxu0 0.0
        %219 = vmatpush1.msra.mxu0 %v177
        %220 = vmatprep.subr.mxu0 0.0
        %221 = vmatpush1.msra.mxu0 %v176
        %222 = vmatprep.subr.mxu0 0.0
        %223 = vmatpush1.msra.mxu0 %v175
        %224 = vmatprep.subr.mxu0 0.0
        %225 = vmatpush1.msra.mxu0 %v174
        %226 = vmatprep.subr.mxu0 0.0
        %227 = vmatpush1.msra.mxu0 %v173
        %228 = vmatprep.subr.mxu0 0.0
        %229 = vmatpush2.msra.mxu0 0.0
        %230 = vmatprep.subr.mxu0 0.0
        %231 = vmatpush2.msra.mxu0 0.0
        %232 = vmatprep.subr.mxu0 0.0
        %233 = vmatpush2.msra.mxu0 0.0
        %234 = vmatprep.subr.mxu0 0.0
        %235 = vmatpush2.msra.mxu0 0.0
        %236 = vmatprep.subr.mxu0 0.0
        %237 = vmatpush2.msra.mxu0 0.0
        %238 = vmatprep.subr.mxu0 0.0
        %239 = vmatpush2.msra.mxu0 0.0
        %240 = vmatprep.subr.mxu0 0.0
        %241 = vmatpush2.msra.mxu0 0.0
        %242 = vmatprep.subr.mxu0 0.0
        %243 = vmatpush2.msra.mxu0 0.0
        %244 = vmatprep.subr.mxu0 0.0
        %245 = vmatpush2.msra.mxu0 0.0
        %246 = vmatprep.subr.mxu0 0.0
        %247 = vmatpush2.msra.mxu0 0.0
        %248 = vmatprep.subr.mxu0 0.0
        %249 = vmatpush2.msra.mxu0 0.0
        %250 = vmatprep.subr.mxu0 0.0
        %251 = vmatpush2.msra.mxu0 0.0
        %252 = vmatprep.subr.mxu0 0.0
        %253 = vmatpush2.msra.mxu0 0.0
        %254 = vmatprep.subr.mxu0 0.0
        %255 = vmatpush2.msra.mxu0 0.0
        %256 = vmatprep.subr.mxu0 0.0
        %257 = vmatpush2.msra.mxu0 0.0
        %258 = vmatprep.subr.mxu0 0.0
        %259 = vmatpush2.msra.mxu0 0.0
        %260 = vmatprep.mubr.f32.mxu0 0.0
        %261 = vmatmul.mubr.f32.gmra.mxu0 %v172
        %v262 = vpop.f32.mrf.mxu0
        %v263 = vadd.f32 %v194, %v262
        %v264 = vpop.f32.mrf.mxu0
        %265 = vdwg.mxu0
        %v266 = vmax.f32 %v263, 0.0
        %267 = vst [vmem:[%s165] sm:$0xff] %v266
        %s268 = sand.u32 %s93, 1
        %s269 = scalar_lea.sflag [#allocation3], %s268
        %s270 = sand.u32 %s93, 1
        %s271 = smul.addr %s270, 8
        %s272 = scalar_lea.vmem [#allocation2], %s271
        // Predicated region
        $region33: #{_last_step_impl.1} parent=31 // pred_check
          %p273 = pneg %p103
        $region34: #{_last_step_impl.1} parent=31 // pred_check_branch
          %275 = sbr.rel (%p273) target = $region36
        $region35: #{_last_step_impl.1} parent=31 // pred_region
          %s277 = ssub.s32 128, 128
          %278 = vsyncadd %s269, %s277
          %s279 = smul.addr %s17, 128
          %s280 = scalar_lea.hbm %s3, %s279
          %s282 = sshll.u32 %s272, 4
          %s283 = int_to_ptr.vmem [resolvable:$true] %s282
          %285 = dma.vmem_to_hbm [thread:$0]  %s283, 128, %s280, %s269
        $region36: #{_last_step_impl.1} parent=31 // pred_fallthru
          _
      $region32: #{_last_step_impl.1} parent=5 // pred_fallthru
        _
      %p286 = scmp.le.s32.totalorder 2, %s12
      // Predicated region
      $region37: #{_last_step_impl.1} parent=5 // pred_check
        %p287 = pneg %p286
      $region38: #{_last_step_impl.1} parent=5 // pred_check_branch
        %289 = sbr.rel (%p287) target = $region40
      $region39: #{_last_step_impl.1} parent=5 // pred_region
        %s290 = ssub.s32 %s12, 2
        // Predicated region
        $region41: #{_last_step_impl.1} parent=39 // pred_check
          %p291 = pneg %p109
        $region42: #{_last_step_impl.1} parent=39 // pred_check_branch
          %293 = sbr.rel (%p291) target = $region44
        $region43: #{_last_step_impl.1} parent=39 // pred_region
          %s294 = sand.u32 %s94, 1
          %s295 = scalar_lea.sflag [#allocation3], %s294
          %s296 = sand.u32 %s94, 1
          %s297 = smul.addr %s296, 8
          %s298 = scalar_lea.vmem [#allocation2], %s297
          %299 = dma.done %s295, 128
        $region44: #{_last_step_impl.1} parent=39 // pred_fallthru
          _
      $region40: #{_last_step_impl.1} parent=5 // pred_fallthru
        _
    $region6: #{_last_step_impl.1} parent=1 // loop_footer
      %s16 = sadd.s32 1, %s12
    $region7: #{_last_step_impl.1} parent=1 // loop_footer_branch
      %11 = sbr.rel target = $region3
    $region8: #{_last_step_impl.1} parent=1 // loop_exit
      _
    %300 = vsyncpa [#allocation3], 1
    %s301 = scalar_lea.sflag [#allocation3], 1
    %302 = vsyncpa %s301, 1

</llo_original>
